<compile_context>
chip_gen: v6e
topology: v6e:2x2x1
jax: 0.10.0
libtpu: 0.0.40
codegen_flags: <defaults>
</compile_context>

<pallas_src>
import jax
import jax.numpy as jnp
from jax import lax
from jax.experimental import pallas as pl
from jax.experimental.pallas import tpu as pltpu


def _local_inference_kernel(p_ref, h_ref, maskp_ref, maskh_ref):
    # p_ref: (Bt, Lp, D), h_ref: (Bt, Lh, D)  -- Bt batch elements per grid step.
    p = p_ref[...]                       # (Bt, Lp, D) in input dtype
    h = h_ref[...]                       # (Bt, Lh, D)
    D = p_ref.shape[-1]

    # bf16 operands for the MXU (f32 accumulation keeps precision).
    p_bf = p.astype(jnp.bfloat16)
    h_bf = h.astype(jnp.bfloat16)

    # e[b, i, j] = <p_bi, h_bj>; contraction folded into the matmul (no explicit .T).
    e = lax.dot_general(
        p_bf, h_bf,
        dimension_numbers=(((2,), (2,)), ((0,), (0,))),
        preferred_element_type=jnp.float32)                       # (Bt, Lp, Lh)

    # --- softmax over hypothesis axis (torch dim=2) -> attention for premise ---
    m2 = jnp.max(e, axis=2, keepdims=True)
    x2 = jnp.exp(e - m2)
    attn_p = x2 * pl.reciprocal(jnp.sum(x2, axis=2, keepdims=True), approx=True)
    p_bar = lax.dot_general(
        attn_p.astype(jnp.bfloat16), h_bf,
        dimension_numbers=(((2,), (1,)), ((0,), (0,))),
        preferred_element_type=jnp.float32)                       # (Bt, Lp, D)

    # --- softmax over premise axis (torch dim=1) -> attention for hypothesis ---
    # NOTE: per-axis max is kept (no shared global-max exp) for numerical safety.
    m1 = jnp.max(e, axis=1, keepdims=True)
    x1 = jnp.exp(e - m1)
    attn_h = x1 * pl.reciprocal(jnp.sum(x1, axis=1, keepdims=True), approx=True)
    # h_bar[b, j, :] = sum_i attn_h[b, i, j] * p[b, i, :]   (contract premise axis;
    # no materialized transpose of attn_h).
    h_bar = lax.dot_general(
        attn_h.astype(jnp.bfloat16), p_bf,
        dimension_numbers=(((1,), (1,)), ((0,), (0,))),
        preferred_element_type=jnp.float32)                       # (Bt, Lh, D)

    # Enhancement features [x, x~, x - x~, x * x~]: direct sliced stores,
    # no (L, 4D) concatenate temporary.
    out_dt = maskp_ref.dtype
    maskp_ref[:, :, 0:D]       = p.astype(out_dt)
    maskp_ref[:, :, D:2 * D]   = p_bar.astype(out_dt)
    maskp_ref[:, :, 2 * D:3 * D] = (p - p_bar).astype(out_dt)
    maskp_ref[:, :, 3 * D:4 * D] = (p * p_bar).astype(out_dt)

    out_dt_h = maskh_ref.dtype
    maskh_ref[:, :, 0:D]       = h.astype(out_dt_h)
    maskh_ref[:, :, D:2 * D]   = h_bar.astype(out_dt_h)
    maskh_ref[:, :, 2 * D:3 * D] = (h - h_bar).astype(out_dt_h)
    maskh_ref[:, :, 3 * D:4 * D] = (h * h_bar).astype(out_dt_h)


def _pick_block_b(B, max_bt=8):
    """Largest divisor of B that is <= max_bt (amortizes per-step overhead)."""
    for cand in range(min(B, max_bt), 0, -1):
        if B % cand == 0:
            return cand
    return 1


def local_inference(p, h):
    """p: (B, Lp, D), h: (B, Lh, D)  ->  (maskp (B,Lp,4D), maskh (B,Lh,4D))."""
    B, Lp, D = p.shape
    _, Lh, _ = h.shape
    bt = _pick_block_b(B)

    item = jnp.dtype(p.dtype).itemsize
    # Double-buffered I/O tiles + f32 intermediates (e / exp / attn / *_bar).
    io_bytes = 2 * (bt * Lp * D + bt * Lh * D
                    + bt * Lp * 4 * D + bt * Lh * 4 * D) * item
    tmp_bytes = 3 * bt * Lp * Lh * 4 + 2 * (bt * Lp * D + bt * Lh * D) * 4
    vmem_limit = min(max(int(1.5 * (io_bytes + tmp_bytes)), 32 * 1024 * 1024),
                     64 * 1024 * 1024)   # stay within v7x's 64 MiB physical VMEM

    grid_spec = pltpu.PrefetchScalarGridSpec(
        num_scalar_prefetch=0,
        grid=(B // bt,),
        in_specs=[
            pl.BlockSpec((bt, Lp, D), lambda b: (b, 0, 0)),
            pl.BlockSpec((bt, Lh, D), lambda b: (b, 0, 0)),
        ],
        out_specs=[
            pl.BlockSpec((bt, Lp, 4 * D), lambda b: (b, 0, 0)),
            pl.BlockSpec((bt, Lh, 4 * D), lambda b: (b, 0, 0)),
        ],
    )

    return pl.pallas_call(
        _local_inference_kernel,
        out_shape=(
            jax.ShapeDtypeStruct((B, Lp, 4 * D), p.dtype),
            jax.ShapeDtypeStruct((B, Lh, 4 * D), h.dtype),
        ),
        grid_spec=grid_spec,
        compiler_params=pltpu.CompilerParams(
            dimension_semantics=("parallel",),       # megacore: split batch on v7x
            vmem_limit_bytes=vmem_limit),
    )(p, h)


def _reference(p, h):
    """Pure-JAX reference mirroring the kernel's bf16-matmul / f32-accum precision."""
    pb = p.astype(jnp.bfloat16)
    hb = h.astype(jnp.bfloat16)
    e = jnp.einsum("bpd,bhd->bph", pb, hb, preferred_element_type=jnp.float32)
    attn_p = jax.nn.softmax(e, axis=2)
    p_bar = jnp.einsum("bph,bhd->bpd", attn_p.astype(jnp.bfloat16), hb,
                       preferred_element_type=jnp.float32)
    attn_h = jax.nn.softmax(e, axis=1)
    h_bar = jnp.einsum("bph,bpd->bhd", attn_h.astype(jnp.bfloat16), pb,
                       preferred_element_type=jnp.float32)
    maskp = jnp.concatenate([p, p_bar, p - p_bar, p * p_bar], axis=-1)
    maskh = jnp.concatenate([h, h_bar, h - h_bar, h * h_bar], axis=-1)
    return maskp, maskh


if __name__ == "__main__":
    key = jax.random.PRNGKey(0)
    kp, kh = jax.random.split(key)

    B, Lp, Lh, D = 2, 8, 8, 32
    p = jax.random.normal(kp, (B, Lp, D), dtype=jnp.float32)
    h = jax.random.normal(kh, (B, Lh, D), dtype=jnp.float32)

    maskp, maskh = local_inference(p, h)
    jax.block_until_ready((maskp, maskh))

    ref_p, ref_h = _reference(p, h)
    assert maskp.shape == (B, Lp, 4 * D) and maskh.shape == (B, Lh, 4 * D)
    assert jnp.allclose(maskp, ref_p, atol=1e-2, rtol=1e-2)
    assert jnp.allclose(maskh, ref_h, atol=1e-2, rtol=1e-2)

    print("KERNEL_OK")
</pallas_src>

<mosaic_0001>
module attributes {stable_mosaic.version = 11 : i64} {
  func.func @_local_inference_kernel(%arg0: i32, %arg1: memref<2x8x32xf32, #tpu.memory_space<vmem>>, %arg2: memref<2x8x32xf32, #tpu.memory_space<vmem>>, %arg3: memref<2x8x128xf32, #tpu.memory_space<vmem>>, %arg4: memref<2x8x128xf32, #tpu.memory_space<vmem>>) attributes {dimension_semantics = [#tpu.dimension_semantics<parallel>], iteration_bounds = array<i64: 1>, scalar_prefetch = 0 : i64, scratch_operands = 0 : i64, tpu.core_type = #tpu.core_type<tc>, window_params = [{transform_indices = @transform_0, window_bounds = array<i64: 2, 8, 32>}, {transform_indices = @transform_1, window_bounds = array<i64: 2, 8, 32>}, {transform_indices = @transform_2, window_bounds = array<i64: 2, 8, 128>}, {transform_indices = @transform_3, window_bounds = array<i64: 2, 8, 128>}]} {
    %c0 = arith.constant 0 : index
    %c0_0 = arith.constant 0 : index
    %c0_1 = arith.constant 0 : index
    %0 = vector.load %arg1[%c0, %c0_0, %c0_1] : memref<2x8x32xf32, #tpu.memory_space<vmem>>, vector<2x8x32xf32>
    %c0_2 = arith.constant 0 : index
    %c0_3 = arith.constant 0 : index
    %c0_4 = arith.constant 0 : index
    %1 = vector.load %arg2[%c0_2, %c0_3, %c0_4] : memref<2x8x32xf32, #tpu.memory_space<vmem>>, vector<2x8x32xf32>
    %2 = arith.truncf %0 : vector<2x8x32xf32> to vector<2x8x32xbf16>
    %3 = arith.truncf %1 : vector<2x8x32xf32> to vector<2x8x32xbf16>
    %cst = arith.constant dense<0.000000e+00> : vector<2x8x8xf32>
    %4 = tpu.matmul %2, %3, %cst {dimension_numbers = #tpu.dot_dimension_numbers<[2], [2], [1], [1], [0, 0, 0, 1, 1, 1], [0], [0]>} : vector<2x8x32xbf16>, vector<2x8x32xbf16>, vector<2x8x8xf32> -> vector<2x8x8xf32>
    %cst_5 = arith.constant dense<0xFF800000> : vector<2x8xf32>
    %5 = vector.multi_reduction <maximumf>, %4, %cst_5 [2] : vector<2x8x8xf32> to vector<2x8xf32>
    %6 = vector.shape_cast %5 : vector<2x8xf32> to vector<2x8x1xf32>
    %7 = vector.broadcast %6 : vector<2x8x1xf32> to vector<2x8x8xf32>
    %8 = arith.subf %4, %7 : vector<2x8x8xf32>
    %9 = math.exp %8 : vector<2x8x8xf32>
    %cst_6 = arith.constant dense<0.000000e+00> : vector<2x8xf32>
    %10 = vector.multi_reduction <add>, %9, %cst_6 [2] : vector<2x8x8xf32> to vector<2x8xf32>
    %11 = vector.shape_cast %10 : vector<2x8xf32> to vector<2x8x1xf32>
    %12 = tpu.reciprocal %11 {approx = true} : vector<2x8x1xf32> -> vector<2x8x1xf32>
    %13 = vector.broadcast %12 : vector<2x8x1xf32> to vector<2x8x8xf32>
    %14 = arith.mulf %9, %13 : vector<2x8x8xf32>
    %15 = arith.truncf %14 : vector<2x8x8xf32> to vector<2x8x8xbf16>
    %cst_7 = arith.constant dense<0.000000e+00> : vector<2x8x32xf32>
    %16 = tpu.matmul %15, %3, %cst_7 {dimension_numbers = #tpu.dot_dimension_numbers<[2], [1], [1], [2], [0, 0, 0, 1, 1, 2], [0], [0]>} : vector<2x8x8xbf16>, vector<2x8x32xbf16>, vector<2x8x32xf32> -> vector<2x8x32xf32>
    %cst_8 = arith.constant dense<0xFF800000> : vector<2x8xf32>
    %17 = vector.multi_reduction <maximumf>, %4, %cst_8 [1] : vector<2x8x8xf32> to vector<2x8xf32>
    %18 = vector.shape_cast %17 : vector<2x8xf32> to vector<2x1x8xf32>
    %19 = vector.broadcast %18 : vector<2x1x8xf32> to vector<2x8x8xf32>
    %20 = arith.subf %4, %19 : vector<2x8x8xf32>
    %21 = math.exp %20 : vector<2x8x8xf32>
    %cst_9 = arith.constant dense<0.000000e+00> : vector<2x8xf32>
    %22 = vector.multi_reduction <add>, %21, %cst_9 [1] : vector<2x8x8xf32> to vector<2x8xf32>
    %23 = vector.shape_cast %22 : vector<2x8xf32> to vector<2x1x8xf32>
    %24 = tpu.reciprocal %23 {approx = true} : vector<2x1x8xf32> -> vector<2x1x8xf32>
    %25 = vector.broadcast %24 : vector<2x1x8xf32> to vector<2x8x8xf32>
    %26 = arith.mulf %21, %25 : vector<2x8x8xf32>
    %27 = arith.truncf %26 : vector<2x8x8xf32> to vector<2x8x8xbf16>
    %cst_10 = arith.constant dense<0.000000e+00> : vector<2x8x32xf32>
    %28 = tpu.matmul %27, %2, %cst_10 {dimension_numbers = #tpu.dot_dimension_numbers<[1], [1], [2], [2], [0, 0, 0, 2, 1, 2], [0], [0]>} : vector<2x8x8xbf16>, vector<2x8x32xbf16>, vector<2x8x32xf32> -> vector<2x8x32xf32>
    %c0_11 = arith.constant 0 : index
    %c0_12 = arith.constant 0 : index
    %c0_13 = arith.constant 0 : index
    %29 = vector.load %arg3[%c0_11, %c0_12, %c0_13] : memref<2x8x128xf32, #tpu.memory_space<vmem>>, vector<2x8x32xf32>
    tpu.vector_store %arg3[%c0_11, %c0_12, %c0_13], %0 {strides = array<i32>} : memref<2x8x128xf32, #tpu.memory_space<vmem>>, vector<2x8x32xf32>,
    %c0_14 = arith.constant 0 : index
    %c0_15 = arith.constant 0 : index
    %c32 = arith.constant 32 : index
    %30 = vector.load %arg3[%c0_14, %c0_15, %c32] : memref<2x8x128xf32, #tpu.memory_space<vmem>>, vector<2x8x32xf32>
    tpu.vector_store %arg3[%c0_14, %c0_15, %c32], %16 {strides = array<i32>} : memref<2x8x128xf32, #tpu.memory_space<vmem>>, vector<2x8x32xf32>,
    %31 = arith.subf %0, %16 : vector<2x8x32xf32>
    %c0_16 = arith.constant 0 : index
    %c0_17 = arith.constant 0 : index
    %c64 = arith.constant 64 : index
    %32 = vector.load %arg3[%c0_16, %c0_17, %c64] : memref<2x8x128xf32, #tpu.memory_space<vmem>>, vector<2x8x32xf32>
    tpu.vector_store %arg3[%c0_16, %c0_17, %c64], %31 {strides = array<i32>} : memref<2x8x128xf32, #tpu.memory_space<vmem>>, vector<2x8x32xf32>,
    %33 = arith.mulf %0, %16 : vector<2x8x32xf32>
    %c0_18 = arith.constant 0 : index
    %c0_19 = arith.constant 0 : index
    %c96 = arith.constant 96 : index
    %34 = vector.load %arg3[%c0_18, %c0_19, %c96] : memref<2x8x128xf32, #tpu.memory_space<vmem>>, vector<2x8x32xf32>
    tpu.vector_store %arg3[%c0_18, %c0_19, %c96], %33 {strides = array<i32>} : memref<2x8x128xf32, #tpu.memory_space<vmem>>, vector<2x8x32xf32>,
    %c0_20 = arith.constant 0 : index
    %c0_21 = arith.constant 0 : index
    %c0_22 = arith.constant 0 : index
    %35 = vector.load %arg4[%c0_20, %c0_21, %c0_22] : memref<2x8x128xf32, #tpu.memory_space<vmem>>, vector<2x8x32xf32>
    tpu.vector_store %arg4[%c0_20, %c0_21, %c0_22], %1 {strides = array<i32>} : memref<2x8x128xf32, #tpu.memory_space<vmem>>, vector<2x8x32xf32>,
    %c0_23 = arith.constant 0 : index
    %c0_24 = arith.constant 0 : index
    %c32_25 = arith.constant 32 : index
    %36 = vector.load %arg4[%c0_23, %c0_24, %c32_25] : memref<2x8x128xf32, #tpu.memory_space<vmem>>, vector<2x8x32xf32>
    tpu.vector_store %arg4[%c0_23, %c0_24, %c32_25], %28 {strides = array<i32>} : memref<2x8x128xf32, #tpu.memory_space<vmem>>, vector<2x8x32xf32>,
    %37 = arith.subf %1, %28 : vector<2x8x32xf32>
    %c0_26 = arith.constant 0 : index
    %c0_27 = arith.constant 0 : index
    %c64_28 = arith.constant 64 : index
    %38 = vector.load %arg4[%c0_26, %c0_27, %c64_28] : memref<2x8x128xf32, #tpu.memory_space<vmem>>, vector<2x8x32xf32>
    tpu.vector_store %arg4[%c0_26, %c0_27, %c64_28], %37 {strides = array<i32>} : memref<2x8x128xf32, #tpu.memory_space<vmem>>, vector<2x8x32xf32>,
    %39 = arith.mulf %1, %28 : vector<2x8x32xf32>
    %c0_29 = arith.constant 0 : index
    %c0_30 = arith.constant 0 : index
    %c96_31 = arith.constant 96 : index
    %40 = vector.load %arg4[%c0_29, %c0_30, %c96_31] : memref<2x8x128xf32, #tpu.memory_space<vmem>>, vector<2x8x32xf32>
    tpu.vector_store %arg4[%c0_29, %c0_30, %c96_31], %39 {strides = array<i32>} : memref<2x8x128xf32, #tpu.memory_space<vmem>>, vector<2x8x32xf32>,
    return
  }
  func.func @transform_0(%arg0: i32) -> (i32, i32, i32) {
    %c0_i32 = arith.constant 0 : i32
    %c0_i32_0 = arith.constant 0 : i32
    %c0_i32_1 = arith.constant 0 : i32
    return %arg0, %c0_i32, %c0_i32_0 : i32, i32, i32
  }
  func.func @transform_1(%arg0: i32) -> (i32, i32, i32) {
    %c0_i32 = arith.constant 0 : i32
    %c0_i32_0 = arith.constant 0 : i32
    %c0_i32_1 = arith.constant 0 : i32
    return %arg0, %c0_i32, %c0_i32_0 : i32, i32, i32
  }
  func.func @transform_2(%arg0: i32) -> (i32, i32, i32) {
    %c0_i32 = arith.constant 0 : i32
    %c0_i32_0 = arith.constant 0 : i32
    %c0_i32_1 = arith.constant 0 : i32
    return %arg0, %c0_i32, %c0_i32_0 : i32, i32, i32
  }
  func.func @transform_3(%arg0: i32) -> (i32, i32, i32) {
    %c0_i32 = arith.constant 0 : i32
    %c0_i32_0 = arith.constant 0 : i32
    %c0_i32_1 = arith.constant 0 : i32
    return %arg0, %c0_i32, %c0_i32_0 : i32, i32, i32
  }
}

</mosaic_0001>

<llo_original>
// kernel: tpu_custom_call.1
$region0: #{tpu_custom_call.1}
  #allocation0 [shape = 'u32[]', space=smem, size = 0x4, offset = 0x4, fixed_abs, tag = 'smem constant byte address 0x4 - core index']
  #allocation1 [shape = 'u32[144,128]{1,0:T(1,128)}', space=vmem, size = 0x12000, scoped, tag = 'internal scratch']
  %s0 = inlined_call_operand.hbm [shape: f32[2,8,32], index: 0, kind: input, shape index: {}]
  %s1 = inlined_call_operand.hbm [shape: f32[2,8,32], index: 1, kind: input, shape index: {}]
  %s2 = inlined_call_operand.hbm [shape: f32[2,8,128], index: 2, kind: output, shape index: {0}]
  %s3 = inlined_call_operand.hbm [shape: f32[2,8,128], index: 3, kind: output, shape index: {1}]
  %4 = xla_tuple %s2, %s3
  %s5 = sld [smem:[#allocation0]]
  $region34: #{tpu_custom_call.1} parent=0
    _
  %s7 = ssub.s32 1, %s5
  %s8 = scalar_select 0, %s7, %s5
  $region1: #{tpu_custom_call.1} parent=0
    #allocation2 [shape = 'u8[8192]{0}', space=vmem, size = 0x2000, scoped, tag = 'input window, operand 0, single buffered']
    #allocation3 [shape = 's32[1]{0}', space=sflag, size = 0x4, scoped, tag = 'scoped memory for tpu_custom_call.1']
    #allocation4 [shape = 's32[1]{0}', space=sflag, size = 0x4, scoped, tag = 'scoped memory for tpu_custom_call.1']
    #allocation5 [shape = 'u8[8192]{0}', space=vmem, size = 0x2000, scoped, tag = 'input window, operand 1, single buffered']
    #allocation6 [shape = 's32[1]{0}', space=sflag, size = 0x4, scoped, tag = 'scoped memory for tpu_custom_call.1']
    #allocation7 [shape = 'u8[8192]{0}', space=vmem, size = 0x2000, scoped, tag = 'output window, operand 0, single buffered']
    #allocation8 [shape = 'u8[8192]{0}', space=vmem, size = 0x2000, scoped, tag = 'output window, operand 1, single buffered']
    #allocation9 [shape = 's32[1]{0}', space=sflag, size = 0x4, scoped, tag = 'scoped memory for tpu_custom_call.1']
    %9 = vsyncpa [#allocation3], 0
    %10 = vsyncpa [#allocation6], 0
    %11 = vsyncpa [#allocation4], 0
    %12 = vsyncpa [#allocation9], 0
    // Predicated region
    $region2: #{tpu_custom_call.1} parent=1 // pred_check
      _
    $region3: #{tpu_custom_call.1} parent=1 // pred_check_branch
      %14 = sbr.rel (0) target = $region5
    $region4: #{tpu_custom_call.1} parent=1 // pred_region
      %s16 = ssub.s32 256, 256
      %17 = vsyncadd [#allocation3], %s16
      %s18 = sshll.u32 [#allocation2], 4
      %s19 = int_to_ptr.vmem [resolvable:$true] %s18
      %24 = dma.hbm_to_vmem [thread:$0]  %s0, 256, %s19, [#allocation3], 128, 128, 8
    $region5: #{tpu_custom_call.1} parent=1 // pred_fallthru
      _
    // Predicated region
    $region6: #{tpu_custom_call.1} parent=1 // pred_check
      _
    $region7: #{tpu_custom_call.1} parent=1 // pred_check_branch
      %26 = sbr.rel (0) target = $region9
    $region8: #{tpu_custom_call.1} parent=1 // pred_region
      %s28 = ssub.s32 256, 256
      %29 = vsyncadd [#allocation6], %s28
      %s30 = sshll.u32 [#allocation5], 4
      %s31 = int_to_ptr.vmem [resolvable:$true] %s30
      %36 = dma.hbm_to_vmem [thread:$0]  %s1, 256, %s31, [#allocation6], 128, 128, 8
    $region9: #{tpu_custom_call.1} parent=1 // pred_fallthru
      _
    // Predicated region
    $region10: #{tpu_custom_call.1} parent=1 // pred_check
      _
    $region11: #{tpu_custom_call.1} parent=1 // pred_check_branch
      %38 = sbr.rel (0) target = $region13
    $region12: #{tpu_custom_call.1} parent=1 // pred_region
      %39 = dma.done [#allocation3], 256
    $region13: #{tpu_custom_call.1} parent=1 // pred_fallthru
      _
    // Predicated region
    $region14: #{tpu_custom_call.1} parent=1 // pred_check
      _
    $region15: #{tpu_custom_call.1} parent=1 // pred_check_branch
      %41 = sbr.rel (0) target = $region17
    $region16: #{tpu_custom_call.1} parent=1 // pred_region
      %42 = dma.done [#allocation6], 256
    $region17: #{tpu_custom_call.1} parent=1 // pred_fallthru
      _
    %v44 = vld [vmem:[#allocation2] sm:$0xff]
    %v45 = vld [vmem:[#allocation2 + $0x8] sm:$0xff]
    %v46 = vld [vmem:[#allocation5] sm:$0xff]
    %v47 = vld [vmem:[#allocation5 + $0x8] sm:$0xff]
    %v48 = vpack.c.bf16 %v44, %v44
    %v49 = vpack.c.bf16 %v45, %v45
    %v50 = vpack.c.bf16 %v46, %v46
    %v51 = vpack.c.bf16 %v47, %v47
    %vm52 = vcmask 261120
    %v54 = vsel %vm52, %v48, 0
    %v57 = vsel %vm52, %v50, 0
    %59 = vmatprep.subr.bf16.mxu0 0
    %60 = vmatpush1.bf16.xpose.msra.mxu0 0
    %61 = vmatprep.subr.bf16.mxu0 0
    %62 = vmatpush1.bf16.xpose.msra.mxu0 0
    %63 = vmatprep.subr.bf16.mxu0 0
    %64 = vmatpush1.bf16.xpose.msra.mxu0 0
    %65 = vmatprep.subr.bf16.mxu0 0
    %66 = vmatpush1.bf16.xpose.msra.mxu0 0
    %67 = vmatprep.subr.bf16.mxu0 0
    %68 = vmatpush1.bf16.xpose.msra.mxu0 0
    %69 = vmatprep.subr.bf16.mxu0 0
    %70 = vmatpush1.bf16.xpose.msra.mxu0 0
    %71 = vmatprep.subr.bf16.mxu0 0
    %72 = vmatpush1.bf16.xpose.msra.mxu0 0
    %73 = vmatprep.subr.bf16.mxu0 0
    %74 = vmatpush1.bf16.xpose.msra.mxu0 %v57
    %75 = vmatprep.subr.bf16.mxu0 0
    %76 = vmatpush2.bf16.xpose.msra.mxu0 0
    %77 = vmatprep.subr.bf16.mxu0 0
    %78 = vmatpush2.bf16.xpose.msra.mxu0 0
    %79 = vmatprep.subr.bf16.mxu0 0
    %80 = vmatpush2.bf16.xpose.msra.mxu0 0
    %81 = vmatprep.subr.bf16.mxu0 0
    %82 = vmatpush2.bf16.xpose.msra.mxu0 0
    %83 = vmatprep.subr.bf16.mxu0 0
    %84 = vmatpush2.bf16.xpose.msra.mxu0 0
    %85 = vmatprep.subr.bf16.mxu0 0
    %86 = vmatpush2.bf16.xpose.msra.mxu0 0
    %87 = vmatprep.subr.bf16.mxu0 0
    %88 = vmatpush2.bf16.xpose.msra.mxu0 0
    %89 = vmatprep.subr.bf16.mxu0 0
    %90 = vmatpush2.bf16.xpose.msra.mxu0 0
    %91 = vmatprep.mubr.bf16.mxu0 0
    %92 = vmatmul.mubr.bf16.gmra.mxu0 %v54
    %v93 = vpop.f32.mrf.mxu0
    %v94 = vadd.f32 0.0, %v93
    %v95 = vpop.f32.mrf.mxu0
    %v96 = vpop.f32.mrf.mxu0
    %v97 = vpop.f32.mrf.mxu0
    %98 = vdwg.mxu0
    %v100 = vsel %vm52, %v49, 0
    %v103 = vsel %vm52, %v51, 0
    %105 = vmatprep.subr.bf16.mxu0 0
    %106 = vmatpush1.bf16.xpose.msra.mxu0 0
    %107 = vmatprep.subr.bf16.mxu0 0
    %108 = vmatpush1.bf16.xpose.msra.mxu0 0
    %109 = vmatprep.subr.bf16.mxu0 0
    %110 = vmatpush1.bf16.xpose.msra.mxu0 0
    %111 = vmatprep.subr.bf16.mxu0 0
    %112 = vmatpush1.bf16.xpose.msra.mxu0 0
    %113 = vmatprep.subr.bf16.mxu0 0
    %114 = vmatpush1.bf16.xpose.msra.mxu0 0
    %115 = vmatprep.subr.bf16.mxu0 0
    %116 = vmatpush1.bf16.xpose.msra.mxu0 0
    %117 = vmatprep.subr.bf16.mxu0 0
    %118 = vmatpush1.bf16.xpose.msra.mxu0 0
    %119 = vmatprep.subr.bf16.mxu0 0
    %120 = vmatpush1.bf16.xpose.msra.mxu0 %v103
    %121 = vmatprep.subr.bf16.mxu0 0
    %122 = vmatpush2.bf16.xpose.msra.mxu0 0
    %123 = vmatprep.subr.bf16.mxu0 0
    %124 = vmatpush2.bf16.xpose.msra.mxu0 0
    %125 = vmatprep.subr.bf16.mxu0 0
    %126 = vmatpush2.bf16.xpose.msra.mxu0 0
    %127 = vmatprep.subr.bf16.mxu0 0
    %128 = vmatpush2.bf16.xpose.msra.mxu0 0
    %129 = vmatprep.subr.bf16.mxu0 0
    %130 = vmatpush2.bf16.xpose.msra.mxu0 0
    %131 = vmatprep.subr.bf16.mxu0 0
    %132 = vmatpush2.bf16.xpose.msra.mxu0 0
    %133 = vmatprep.subr.bf16.mxu0 0
    %134 = vmatpush2.bf16.xpose.msra.mxu0 0
    %135 = vmatprep.subr.bf16.mxu0 0
    %136 = vmatpush2.bf16.xpose.msra.mxu0 0
    %137 = vmatprep.mubr.bf16.mxu0 0
    %138 = vmatmul.mubr.bf16.gmra.mxu0 %v100
    %v139 = vpop.f32.mrf.mxu0
    %v140 = vadd.f32 0.0, %v139
    %v141 = vpop.f32.mrf.mxu0
    %v142 = vpop.f32.mrf.mxu0
    %v143 = vpop.f32.mrf.mxu0
    %144 = vdwg.mxu0
    %vm145 = vcmask 64512
    %v146 = vsel %vm145, %v94, -inf
    %147 = vmax.xlane.f32.xlu0 %v146
    %v148 = vpop.xlane.xlu0 %147
    %v149 = vsel %vm145, %v140, -inf
    %150 = vmax.xlane.f32.xlu0 %v149
    %v151 = vpop.xlane.xlu0 %150
    %v152 = vsub.f32 %v94, %v148
    %v153 = vsub.f32 %v140, %v151
    %v154 = vmul.f32 %v152, 1.442695
    %v155 = vpow.pop %v154
    %v156 = vmul.f32 %v153, 1.442695
    %v157 = vpow.pop %v156
    %v158 = vsel %vm145, %v155, 0.0
    %159 = vadd.xlane.f32.xlu0 %v158
    %v160 = vpop.xlane.xlu0 %159
    %v161 = vsel %vm145, %v157, 0.0
    %162 = vadd.xlane.f32.xlu0 %v161
    %v163 = vpop.xlane.xlu0 %162
    %v164 = vrcp.pop %v160
    %v165 = vrcp.pop %v163
    %v166 = vmul.f32 %v155, %v164
    %v167 = vmul.f32 %v157, %v165
    %v168 = vpack.c.bf16 %v166, %v166
    %v169 = vpack.c.bf16 %v167, %v167
    %v171 = vsel %vm145, %v168, 0
    %vm173 = vcmask 1043456
    %v174 = vsel %vm173, %v50, 0
    %176 = vmatprep.subr.bf16.mxu0 0
    %177 = vmatpush1.bf16.msra.mxu0 0
    %178 = vmatprep.subr.bf16.mxu0 0
    %179 = vmatpush1.bf16.msra.mxu0 0
    %180 = vmatprep.subr.bf16.mxu0 0
    %181 = vmatpush1.bf16.msra.mxu0 0
    %182 = vmatprep.subr.bf16.mxu0 0
    %183 = vmatpush1.bf16.msra.mxu0 0
    %184 = vmatprep.subr.bf16.mxu0 0
    %185 = vmatpush1.bf16.msra.mxu0 0
    %186 = vmatprep.subr.bf16.mxu0 0
    %187 = vmatpush1.bf16.msra.mxu0 0
    %188 = vmatprep.subr.bf16.mxu0 0
    %189 = vmatpush1.bf16.msra.mxu0 0
    %190 = vmatprep.subr.bf16.mxu0 0
    %191 = vmatpush1.bf16.msra.mxu0 %v174
    %192 = vmatprep.subr.bf16.mxu0 0
    %193 = vmatpush2.bf16.msra.mxu0 0
    %194 = vmatprep.subr.bf16.mxu0 0
    %195 = vmatpush2.bf16.msra.mxu0 0
    %196 = vmatprep.subr.bf16.mxu0 0
    %197 = vmatpush2.bf16.msra.mxu0 0
    %198 = vmatprep.subr.bf16.mxu0 0
    %199 = vmatpush2.bf16.msra.mxu0 0
    %200 = vmatprep.subr.bf16.mxu0 0
    %201 = vmatpush2.bf16.msra.mxu0 0
    %202 = vmatprep.subr.bf16.mxu0 0
    %203 = vmatpush2.bf16.msra.mxu0 0
    %204 = vmatprep.subr.bf16.mxu0 0
    %205 = vmatpush2.bf16.msra.mxu0 0
    %206 = vmatprep.subr.bf16.mxu0 0
    %207 = vmatpush2.bf16.msra.mxu0 0
    %208 = vmatprep.mubr.bf16.mxu0 0
    %209 = vmatmul.mubr.bf16.gmra.mxu0 %v171
    %v210 = vpop.f32.mrf.mxu0
    %v211 = vadd.f32 0.0, %v210
    %v212 = vpop.f32.mrf.mxu0
    %v213 = vpop.f32.mrf.mxu0
    %v214 = vpop.f32.mrf.mxu0
    %215 = vdwg.mxu0
    %v217 = vsel %vm145, %v169, 0
    %v219 = vsel %vm173, %v51, 0
    %221 = vmatprep.subr.bf16.mxu0 0
    %222 = vmatpush1.bf16.msra.mxu0 0
    %223 = vmatprep.subr.bf16.mxu0 0
    %224 = vmatpush1.bf16.msra.mxu0 0
    %225 = vmatprep.subr.bf16.mxu0 0
    %226 = vmatpush1.bf16.msra.mxu0 0
    %227 = vmatprep.subr.bf16.mxu0 0
    %228 = vmatpush1.bf16.msra.mxu0 0
    %229 = vmatprep.subr.bf16.mxu0 0
    %230 = vmatpush1.bf16.msra.mxu0 0
    %231 = vmatprep.subr.bf16.mxu0 0
    %232 = vmatpush1.bf16.msra.mxu0 0
    %233 = vmatprep.subr.bf16.mxu0 0
    %234 = vmatpush1.bf16.msra.mxu0 0
    %235 = vmatprep.subr.bf16.mxu0 0
    %236 = vmatpush1.bf16.msra.mxu0 %v219
    %237 = vmatprep.subr.bf16.mxu0 0
    %238 = vmatpush2.bf16.msra.mxu0 0
    %239 = vmatprep.subr.bf16.mxu0 0
    %240 = vmatpush2.bf16.msra.mxu0 0
    %241 = vmatprep.subr.bf16.mxu0 0
    %242 = vmatpush2.bf16.msra.mxu0 0
    %243 = vmatprep.subr.bf16.mxu0 0
    %244 = vmatpush2.bf16.msra.mxu0 0
    %245 = vmatprep.subr.bf16.mxu0 0
    %246 = vmatpush2.bf16.msra.mxu0 0
    %247 = vmatprep.subr.bf16.mxu0 0
    %248 = vmatpush2.bf16.msra.mxu0 0
    %249 = vmatprep.subr.bf16.mxu0 0
    %250 = vmatpush2.bf16.msra.mxu0 0
    %251 = vmatprep.subr.bf16.mxu0 0
    %252 = vmatpush2.bf16.msra.mxu0 0
    %253 = vmatprep.mubr.bf16.mxu0 0
    %254 = vmatmul.mubr.bf16.gmra.mxu0 %v217
    %v255 = vpop.f32.mrf.mxu0
    %v256 = vadd.f32 0.0, %v255
    %v257 = vpop.f32.mrf.mxu0
    %v258 = vpop.f32.mrf.mxu0
    %v259 = vpop.f32.mrf.mxu0
    %260 = vdwg.mxu0
    %v261 = vrot.slane %v146, 4
    %v262 = vmax.f32 %v146, %v261
    %v263 = vrot.slane %v262, 2
    %v264 = vmax.f32 %v262, %v263
    %v265 = vrot.slane %v264, 1
    %v266 = vmax.f32 %v264, %v265
    %v267 = vrot.slane %v149, 4
    %v268 = vmax.f32 %v149, %v267
    %v269 = vrot.slane %v268, 2
    %v270 = vmax.f32 %v268, %v269
    %v271 = vrot.slane %v270, 1
    %v272 = vmax.f32 %v270, %v271
    %v273 = vsub.f32 %v94, %v266
    %v274 = vsub.f32 %v140, %v272
    %v275 = vmul.f32 %v273, 1.442695
    %v276 = vpow.pop %v275
    %v277 = vmul.f32 %v274, 1.442695
    %v278 = vpow.pop %v277
    %v279 = vsel %vm145, %v276, 0.0
    %v280 = vrot.slane %v279, 4
    %v281 = vadd.f32 %v279, %v280
    %v282 = vrot.slane %v281, 2
    %v283 = vadd.f32 %v281, %v282
    %v284 = vrot.slane %v283, 1
    %v285 = vadd.f32 %v283, %v284
    %v286 = vsel %vm145, %v278, 0.0
    %v287 = vrot.slane %v286, 4
    %v288 = vadd.f32 %v286, %v287
    %v289 = vrot.slane %v288, 2
    %v290 = vadd.f32 %v288, %v289
    %v291 = vrot.slane %v290, 1
    %v292 = vadd.f32 %v290, %v291
    %v293 = vrcp.pop %v285
    %v294 = vrcp.pop %v292
    %v295 = vmul.f32 %v276, %v293
    %v296 = vmul.f32 %v278, %v294
    %v297 = vpack.c.bf16 %v295, %v295
    %v298 = vpack.c.bf16 %v296, %v296
    %299 = vxpose.xlu0.c.b16.start [1/8] %v297, 128
    %300 = vxpose.xlu0.c.b16.cont [2/8] 0, 128
    %301 = vxpose.xlu0.c.b16.cont [3/8] 0, 128
    %302 = vxpose.xlu0.c.b16.cont [4/8] 0, 128
    %303 = vxpose.xlu0.c.b16.cont [5/8] 0, 128
    %304 = vxpose.xlu0.c.b16.cont [6/8] 0, 128
    %305 = vxpose.xlu0.c.b16.cont [7/8] 0, 128
    %306 = vxpose.xlu0.c.b16.end [8/8] 0, 128
    %v307 = vpop.trf.xlu0
    %v308 = vpop.trf.xlu0
    %v309 = vpop.trf.xlu0
    %v310 = vpop.trf.xlu0
    %v311 = vpop.trf.xlu0
    %v312 = vpop.trf.xlu0
    %v313 = vpop.trf.xlu0
    %v314 = vpop.trf.xlu0
    %v316 = vsel %vm145, %v307, 0
    %v318 = vsel %vm173, %v48, 0
    %320 = vmatprep.subr.bf16.mxu0 0
    %321 = vmatpush1.bf16.msra.mxu0 0
    %322 = vmatprep.subr.bf16.mxu0 0
    %323 = vmatpush1.bf16.msra.mxu0 0
    %324 = vmatprep.subr.bf16.mxu0 0
    %325 = vmatpush1.bf16.msra.mxu0 0
    %326 = vmatprep.subr.bf16.mxu0 0
    %327 = vmatpush1.bf16.msra.mxu0 0
    %328 = vmatprep.subr.bf16.mxu0 0
    %329 = vmatpush1.bf16.msra.mxu0 0
    %330 = vmatprep.subr.bf16.mxu0 0
    %331 = vmatpush1.bf16.msra.mxu0 0
    %332 = vmatprep.subr.bf16.mxu0 0
    %333 = vmatpush1.bf16.msra.mxu0 0
    %334 = vmatprep.subr.bf16.mxu0 0
    %335 = vmatpush1.bf16.msra.mxu0 %v318
    %336 = vmatprep.subr.bf16.mxu0 0
    %337 = vmatpush2.bf16.msra.mxu0 0
    %338 = vmatprep.subr.bf16.mxu0 0
    %339 = vmatpush2.bf16.msra.mxu0 0
    %340 = vmatprep.subr.bf16.mxu0 0
    %341 = vmatpush2.bf16.msra.mxu0 0
    %342 = vmatprep.subr.bf16.mxu0 0
    %343 = vmatpush2.bf16.msra.mxu0 0
    %344 = vmatprep.subr.bf16.mxu0 0
    %345 = vmatpush2.bf16.msra.mxu0 0
    %346 = vmatprep.subr.bf16.mxu0 0
    %347 = vmatpush2.bf16.msra.mxu0 0
    %348 = vmatprep.subr.bf16.mxu0 0
    %349 = vmatpush2.bf16.msra.mxu0 0
    %350 = vmatprep.subr.bf16.mxu0 0
    %351 = vmatpush2.bf16.msra.mxu0 0
    %352 = vmatprep.mubr.bf16.mxu0 0
    %353 = vmatmul.mubr.bf16.gmra.mxu0 %v316
    %v354 = vpop.f32.mrf.mxu0
    %v355 = vadd.f32 0.0, %v354
    %v356 = vpop.f32.mrf.mxu0
    %v357 = vpop.f32.mrf.mxu0
    %v358 = vpop.f32.mrf.mxu0
    %359 = vdwg.mxu0
    %360 = vxpose.xlu0.c.b16.start [1/8] %v298, 128
    %361 = vxpose.xlu0.c.b16.cont [2/8] 0, 128
    %362 = vxpose.xlu0.c.b16.cont [3/8] 0, 128
    %363 = vxpose.xlu0.c.b16.cont [4/8] 0, 128
    %364 = vxpose.xlu0.c.b16.cont [5/8] 0, 128
    %365 = vxpose.xlu0.c.b16.cont [6/8] 0, 128
    %366 = vxpose.xlu0.c.b16.cont [7/8] 0, 128
    %367 = vxpose.xlu0.c.b16.end [8/8] 0, 128
    %v368 = vpop.trf.xlu0
    %v369 = vpop.trf.xlu0
    %v370 = vpop.trf.xlu0
    %v371 = vpop.trf.xlu0
    %v372 = vpop.trf.xlu0
    %v373 = vpop.trf.xlu0
    %v374 = vpop.trf.xlu0
    %v375 = vpop.trf.xlu0
    %v377 = vsel %vm145, %v368, 0
    %v379 = vsel %vm173, %v49, 0
    %381 = vmatprep.subr.bf16.mxu0 0
    %382 = vmatpush1.bf16.msra.mxu0 0
    %383 = vmatprep.subr.bf16.mxu0 0
    %384 = vmatpush1.bf16.msra.mxu0 0
    %385 = vmatprep.subr.bf16.mxu0 0
    %386 = vmatpush1.bf16.msra.mxu0 0
    %387 = vmatprep.subr.bf16.mxu0 0
    %388 = vmatpush1.bf16.msra.mxu0 0
    %389 = vmatprep.subr.bf16.mxu0 0
    %390 = vmatpush1.bf16.msra.mxu0 0
    %391 = vmatprep.subr.bf16.mxu0 0
    %392 = vmatpush1.bf16.msra.mxu0 0
    %393 = vmatprep.subr.bf16.mxu0 0
    %394 = vmatpush1.bf16.msra.mxu0 0
    %395 = vmatprep.subr.bf16.mxu0 0
    %396 = vmatpush1.bf16.msra.mxu0 %v379
    %397 = vmatprep.subr.bf16.mxu0 0
    %398 = vmatpush2.bf16.msra.mxu0 0
    %399 = vmatprep.subr.bf16.mxu0 0
    %400 = vmatpush2.bf16.msra.mxu0 0
    %401 = vmatprep.subr.bf16.mxu0 0
    %402 = vmatpush2.bf16.msra.mxu0 0
    %403 = vmatprep.subr.bf16.mxu0 0
    %404 = vmatpush2.bf16.msra.mxu0 0
    %405 = vmatprep.subr.bf16.mxu0 0
    %406 = vmatpush2.bf16.msra.mxu0 0
    %407 = vmatprep.subr.bf16.mxu0 0
    %408 = vmatpush2.bf16.msra.mxu0 0
    %409 = vmatprep.subr.bf16.mxu0 0
    %410 = vmatpush2.bf16.msra.mxu0 0
    %411 = vmatprep.subr.bf16.mxu0 0
    %412 = vmatpush2.bf16.msra.mxu0 0
    %413 = vmatprep.mubr.bf16.mxu0 0
    %414 = vmatmul.mubr.bf16.gmra.mxu0 %v377
    %v415 = vpop.f32.mrf.mxu0
    %v416 = vadd.f32 0.0, %v415
    %v417 = vpop.f32.mrf.mxu0
    %v418 = vpop.f32.mrf.mxu0
    %v419 = vpop.f32.mrf.mxu0
    %420 = vdwg.mxu0
    %421 = vst.msk [vmem:[#allocation7] sm:$0xff] %vm52, %v44
    %422 = vst.msk [vmem:[#allocation7 + $0x8] sm:$0xff] %vm52, %v45
    %425 = vrot.lane.b32.xlu0 %v211, 32
    %v426 = vpop.permute.xlu0 %425
    %427 = vrot.lane.b32.xlu0 %v256, 32
    %v428 = vpop.permute.xlu0 %427
    %vm431 = vcmask 523520
    %432 = vst.msk [vmem:[#allocation7] sm:$0xff] %vm431, %v426
    %433 = vst.msk [vmem:[#allocation7 + $0x8] sm:$0xff] %vm431, %v428
    %v434 = vsub.f32 %v44, %v211
    %v435 = vsub.f32 %v45, %v256
    %438 = vrot.lane.b32.xlu0 %v434, 64
    %v439 = vpop.permute.xlu0 %438
    %440 = vrot.lane.b32.xlu0 %v435, 64
    %v441 = vpop.permute.xlu0 %440
    %vm444 = vcmask 785920
    %445 = vst.msk [vmem:[#allocation7] sm:$0xff] %vm444, %v439
    %446 = vst.msk [vmem:[#allocation7 + $0x8] sm:$0xff] %vm444, %v441
    %v447 = vmul.f32 %v44, %v211
    %v448 = vmul.f32 %v45, %v256
    %451 = vrot.lane.b32.xlu0 %v447, 96
    %v452 = vpop.permute.xlu0 %451
    %453 = vrot.lane.b32.xlu0 %v448, 96
    %v454 = vpop.permute.xlu0 %453
    %vm457 = vcmask 1048320
    %458 = vst.msk [vmem:[#allocation7] sm:$0xff] %vm457, %v452
    %459 = vst.msk [vmem:[#allocation7 + $0x8] sm:$0xff] %vm457, %v454
    %460 = vst.msk [vmem:[#allocation8] sm:$0xff] %vm52, %v46
    %461 = vst.msk [vmem:[#allocation8 + $0x8] sm:$0xff] %vm52, %v47
    %464 = vrot.lane.b32.xlu0 %v355, 32
    %v465 = vpop.permute.xlu0 %464
    %466 = vrot.lane.b32.xlu0 %v416, 32
    %v467 = vpop.permute.xlu0 %466
    %470 = vst.msk [vmem:[#allocation8] sm:$0xff] %vm431, %v465
    %471 = vst.msk [vmem:[#allocation8 + $0x8] sm:$0xff] %vm431, %v467
    %v472 = vsub.f32 %v46, %v355
    %v473 = vsub.f32 %v47, %v416
    %476 = vrot.lane.b32.xlu0 %v472, 64
    %v477 = vpop.permute.xlu0 %476
    %478 = vrot.lane.b32.xlu0 %v473, 64
    %v479 = vpop.permute.xlu0 %478
    %482 = vst.msk [vmem:[#allocation8] sm:$0xff] %vm444, %v477
    %483 = vst.msk [vmem:[#allocation8 + $0x8] sm:$0xff] %vm444, %v479
    %v484 = vmul.f32 %v46, %v355
    %v485 = vmul.f32 %v47, %v416
    %488 = vrot.lane.b32.xlu0 %v484, 96
    %v489 = vpop.permute.xlu0 %488
    %490 = vrot.lane.b32.xlu0 %v485, 96
    %v491 = vpop.permute.xlu0 %490
    %494 = vst.msk [vmem:[#allocation8] sm:$0xff] %vm457, %v489
    %495 = vst.msk [vmem:[#allocation8 + $0x8] sm:$0xff] %vm457, %v491
    // Predicated region
    $region18: #{tpu_custom_call.1} parent=1 // pred_check
      _
    $region19: #{tpu_custom_call.1} parent=1 // pred_check_branch
      %497 = sbr.rel (0) target = $region21
    $region20: #{tpu_custom_call.1} parent=1 // pred_region
      %s499 = ssub.s32 256, 256
      %500 = vsyncadd [#allocation4], %s499
      %s501 = sshll.u32 [#allocation7], 4
      %s502 = int_to_ptr.vmem [resolvable:$true] %s501
      %507 = dma.vmem_to_hbm [thread:$0]  %s502, 256, %s2, [#allocation4], 128, 128, 8
    $region21: #{tpu_custom_call.1} parent=1 // pred_fallthru
      _
    // Predicated region
    $region22: #{tpu_custom_call.1} parent=1 // pred_check
      _
    $region23: #{tpu_custom_call.1} parent=1 // pred_check_branch
      %509 = sbr.rel (0) target = $region25
    $region24: #{tpu_custom_call.1} parent=1 // pred_region
      %s511 = ssub.s32 256, 256
      %512 = vsyncadd [#allocation9], %s511
      %s513 = sshll.u32 [#allocation8], 4
      %s514 = int_to_ptr.vmem [resolvable:$true] %s513
      %519 = dma.vmem_to_hbm [thread:$0]  %s514, 256, %s3, [#allocation9], 128, 128, 8
    $region25: #{tpu_custom_call.1} parent=1 // pred_fallthru
      _
    // Predicated region
    $region26: #{tpu_custom_call.1} parent=1 // pred_check
      _
    $region27: #{tpu_custom_call.1} parent=1 // pred_check_branch
      %521 = sbr.rel (0) target = $region29
    $region28: #{tpu_custom_call.1} parent=1 // pred_region
      %522 = dma.done [#allocation4], 256
    $region29: #{tpu_custom_call.1} parent=1 // pred_fallthru
      _
    // Predicated region
    $region30: #{tpu_custom_call.1} parent=1 // pred_check
      _
    $region31: #{tpu_custom_call.1} parent=1 // pred_check_branch
      %524 = sbr.rel (0) target = $region33
    $region32: #{tpu_custom_call.1} parent=1 // pred_region
      %525 = dma.done [#allocation9], 256
    $region33: #{tpu_custom_call.1} parent=1 // pred_fallthru
      _
    %526 = vsyncpa [#allocation3], 1
    %527 = vsyncpa [#allocation6], 1
    %528 = vsyncpa [#allocation4], 1
    %529 = vsyncpa [#allocation9], 1

</llo_original>
